<compile_context>
chip_gen: v5e
topology: v5e:2x2
jax: 0.10.0
libtpu: 0.0.40
codegen_flags: <defaults>
</compile_context>

<pallas_src>
import math

import jax
import jax.numpy as jnp
from jax.experimental import pallas as pl
from jax.experimental.pallas import tpu as pltpu


def _program_step_kernel(x_ref, wf_ref, bf_ref, gf_ref, cg_ref, e_ref, s_ref,
                         y_ref):
    """One batch tile of ProgramStep.

    x_ref : (tb, d)    input rows (streaming dtype: f32 or bf16)
    wf_ref: (d, k*d)   fused expert weights, W_i^T stacked along columns
    bf_ref: (1, k*d)   fused expert biases (f32)
    gf_ref: (2d, k)    merged gating matrix [[mu/sigma^2], [-0.5/sigma^2]] (f32)
    cg_ref: (1, k)     per-expert gating constant (f32)
    e_ref : (k, k*d)   0/1 gate-expansion matrix
    s_ref : (k*d, d)   stacked identity matrices (sum over experts)
    y_ref : (tb, d)    output rows
    """
    x_in = x_ref[...]                      # native dtype (bf16 MXU fast path)
    x = x_in.astype(jnp.float32)

    # ---- Gaussian gating logits: ONE f32 matmul, 2d-wide contraction --------
    # lps[b,i] = c_i + sum_j x[b,j]*mu_ij/s2_ij - 0.5 * sum_j x[b,j]^2 / s2_ij
    xg = jnp.concatenate([x, x * x], axis=-1)                          # (tb, 2d)
    lps = (jnp.dot(xg, gf_ref[...], preferred_element_type=jnp.float32)
           + cg_ref[...])                                              # (tb, k)

    # ---- softmax over the expert (lane) axis ---------------------------------
    lps_max = jnp.max(lps, axis=-1, keepdims=True)                     # (tb, 1)
    ps = jnp.exp(lps - lps_max)                                        # (tb, k)
    z = jnp.sum(ps, axis=-1, keepdims=True)                            # (tb, 1)
    # approx reciprocal runs on the EUP; gates sum to 1 within ~1e-4 relative.
    ws = ps * pl.reciprocal(z, approx=True)                            # (tb, k)

    # ---- ONE fused expert matmul: N = k*d (lane-dense) -----------------------
    lin = (jnp.dot(x_in, wf_ref[...], preferred_element_type=jnp.float32)
           + bf_ref[...])                                              # (tb, k*d)
    # sigmoid via a single EUP tanh per element (exp + reciprocal would be two).
    sig = 0.5 * (jnp.tanh(0.5 * lin) + 1.0)                            # (tb, k*d)

    # ---- gate-weighted sum over experts, MXU form (no lane slices) -----------
    wsel = jnp.dot(ws, e_ref[...], preferred_element_type=jnp.float32)    # (tb, k*d)
    y = jnp.dot(sig * wsel, s_ref[...], preferred_element_type=jnp.float32)  # (tb, d)
    y_ref[...] = y.astype(y_ref.dtype)


def _round_up(v, m):
    return (v + m - 1) // m * m


def _pack_params(mu, logsigma, w, bias, stream_dtype):
    """One-time O(k*d^2) layout plumbing, outside the kernel."""
    k, d = mu.shape
    kd = k * d
    mu32 = mu.astype(jnp.float32)
    ls32 = logsigma.astype(jnp.float32)

    # torch.nn.Linear: lin_i = x @ w[i].T + bias[i]  =>  fused RHS column block
    # i holds w[i].T, so the kernel does a single (d_in, k*d_out) matmul operand.
    w_fused = jnp.transpose(w, (2, 0, 1)).reshape(d, kd).astype(stream_dtype)
    bias_fused = bias.reshape(1, kd).astype(jnp.float32)

    inv_s2 = jnp.exp(-2.0 * ls32)                                       # (k, d)
    g_fused = jnp.concatenate(
        [(mu32 * inv_s2).T, -0.5 * inv_s2.T], axis=0)                   # (2d, k)
    cg = (-0.5 * jnp.sum(jnp.log(2.0 * math.pi) + 2.0 * ls32, axis=-1)
          - 0.5 * jnp.sum(mu32 * mu32 * inv_s2, axis=-1))[None, :]      # (1, k)

    # Combine helpers (VMEM-resident, < 20 KiB total).
    e_mat = jnp.repeat(jnp.eye(k, dtype=jnp.float32), d, axis=1)        # (k, kd)
    s_mat = jnp.tile(jnp.eye(d, dtype=jnp.float32), (k, 1))             # (kd, d)
    return w_fused, bias_fused, g_fused, cg, e_mat, s_mat


def program_step(x, mu, logsigma, w, bias, *, tile_b=1024):
    """x: (b, d); mu/logsigma/bias: (k, d); w: (k, d_out, d_in). Returns (b, d).

    Streaming dtype (x tile, fused W, y) follows x.dtype: pass bf16 x to halve
    HBM traffic; f32 inputs are not down-cast in the wrapper.
    """
    b, d = x.shape
    k = mu.shape[0]
    kd = k * d
    stream_dtype = x.dtype

    wf, bf, gf, cg, e_mat, s_mat = _pack_params(mu, logsigma, w, bias,
                                                stream_dtype)

    # Tile: as large as possible (amortize per-grid-step overhead), but aim for
    # >= 4 grid steps so both v7x TensorCores get work and the pipeline ramps.
    # Row tile must be a multiple of 8 unless it covers the whole batch.
    tb = min(max(tile_b, 8), _round_up(pl.cdiv(b, 4), 8))
    if tb >= b:
        tb = b                        # single full-batch tile
    grid = (pl.cdiv(b, tb),)          # ragged last tile; no wrapper-side pad

    return pl.pallas_call(
        _program_step_kernel,
        out_shape=jax.ShapeDtypeStruct((b, d), stream_dtype),
        grid=grid,
        in_specs=[
            pl.BlockSpec((tb, d), lambda i: (i, 0)),      # x tile (pipelined)
            pl.BlockSpec((d, kd), lambda i: (0, 0)),      # fused W (resident)
            pl.BlockSpec((1, kd), lambda i: (0, 0)),      # fused bias (resident)
            pl.BlockSpec((2 * d, k), lambda i: (0, 0)),   # merged gating matrix
            pl.BlockSpec((1, k), lambda i: (0, 0)),       # gating constants
            pl.BlockSpec((k, kd), lambda i: (0, 0)),      # gate expansion E
            pl.BlockSpec((kd, d), lambda i: (0, 0)),      # expert-sum S
        ],
        out_specs=pl.BlockSpec((tb, d), lambda i: (i, 0)),
        compiler_params=pltpu.CompilerParams(
            dimension_semantics=("parallel",)),
    )(x, wf, bf, gf, cg, e_mat, s_mat)


def program_step_ref(x, mu, logsigma, w, bias):
    """Pure-JAX reference mirroring the PyTorch forward."""
    sigma2 = jnp.exp(2.0 * logsigma)
    const = -0.5 * jnp.sum(jnp.log(2.0 * math.pi) + 2.0 * logsigma,
                           axis=1, keepdims=True)
    diff = x[None, :, :] - mu[:, None, :]
    lps = const - 0.5 * jnp.sum(diff * diff / sigma2[:, None, :], axis=-1)
    lps = lps - jnp.max(lps, axis=0, keepdims=True)
    ps = jnp.exp(lps)
    ws = ps / jnp.sum(ps, axis=0, keepdims=True)
    lik = jax.nn.sigmoid(jnp.einsum("bd,kod->kbo", x, w) + bias[:, None, :])
    return jnp.sum(ws[:, :, None] * lik, axis=0)


if __name__ == "__main__":
    # Small shapes consistent with the module: ProgramStep(dim=32, k=4), batch=8.
    batch, dim, k = 8, 32, 4
    key = jax.random.PRNGKey(0)
    kx, kmu, kw, kb = jax.random.split(key, 4)

    x = jax.random.normal(kx, (batch, dim), dtype=jnp.float32)

    # CF_prior params: mu = xavier_init([dim]) -> randn / sqrt(dim/2); logsigma = 0.1.
    xavier_std = 1.0 / math.sqrt(dim / 2.0)
    mu = jax.random.normal(kmu, (k, dim), dtype=jnp.float32) * xavier_std
    logsigma = jnp.full((k, dim), 0.1, dtype=jnp.float32)

    # CF_likelihood params: nn.Linear(dim, dim) -> uniform(-1/sqrt(dim), 1/sqrt(dim)).
    bound = 1.0 / math.sqrt(dim)
    w = jax.random.uniform(kw, (k, dim, dim), dtype=jnp.float32,
                           minval=-bound, maxval=bound)
    bias = jax.random.uniform(kb, (k, dim), dtype=jnp.float32,
                              minval=-bound, maxval=bound)

    y = jax.block_until_ready(program_step(x, mu, logsigma, w, bias))
    y_ref = program_step_ref(x, mu, logsigma, w, bias)
    assert y.shape == (batch, dim)
    assert jnp.allclose(y, y_ref, atol=2e-3, rtol=2e-3), "mismatch vs reference"

    # Ragged multi-tile path: b=20 not divisible by the tile; last block's tail
    # rows are masked on write by Pallas (no wrapper-side pad copy).
    x_big = jax.random.normal(jax.random.PRNGKey(1), (20, dim), dtype=jnp.float32)
    y_big = jax.block_until_ready(
        program_step(x_big, mu, logsigma, w, bias, tile_b=16))
    y_big_ref = program_step_ref(x_big, mu, logsigma, w, bias)
    assert y_big.shape == (20, dim)
    assert jnp.allclose(y_big, y_big_ref, atol=2e-3, rtol=2e-3), "ragged-grid mismatch"

    # bf16 streaming path: x/W/y in bf16 (halved HBM traffic, bf16 MXU fast
    # path); gating/softmax/sigmoid math stays f32 inside the kernel.
    x_bf16 = x_big.astype(jnp.bfloat16)
    y_bf16 = jax.block_until_ready(
        program_step(x_bf16, mu, logsigma, w, bias, tile_b=16))
    y_bf16_ref = program_step_ref(x_bf16.astype(jnp.float32), mu, logsigma, w, bias)
    assert y_bf16.dtype == jnp.bfloat16
    assert jnp.allclose(y_bf16.astype(jnp.float32), y_bf16_ref,
                        atol=2e-2, rtol=2e-2), "bf16-path mismatch"

    print("KERNEL_OK")
</pallas_src>

<mosaic_0001>
module attributes {stable_mosaic.version = 11 : i64} {
  func.func @_program_step_kernel(%arg0: i32, %arg1: memref<8x32xf32, #tpu.memory_space<vmem>>, %arg2: memref<32x128xf32, #tpu.memory_space<vmem>>, %arg3: memref<1x128xf32, #tpu.memory_space<vmem>>, %arg4: memref<64x4xf32, #tpu.memory_space<vmem>>, %arg5: memref<1x4xf32, #tpu.memory_space<vmem>>, %arg6: memref<4x128xf32, #tpu.memory_space<vmem>>, %arg7: memref<128x32xf32, #tpu.memory_space<vmem>>, %arg8: memref<8x32xf32, #tpu.memory_space<vmem>>) attributes {dimension_semantics = [#tpu.dimension_semantics<parallel>], iteration_bounds = array<i64: 1>, scalar_prefetch = 0 : i64, scratch_operands = 0 : i64, tpu.core_type = #tpu.core_type<tc>, window_params = [{transform_indices = @transform_0, window_bounds = array<i64: 8, 32>}, {pipeline_mode = #tpu.pipeline_mode<synchronous>, transform_indices = @transform_1, window_bounds = array<i64: 32, 128>}, {pipeline_mode = #tpu.pipeline_mode<synchronous>, transform_indices = @transform_2, window_bounds = array<i64: 1, 128>}, {pipeline_mode = #tpu.pipeline_mode<synchronous>, transform_indices = @transform_3, window_bounds = array<i64: 64, 4>}, {pipeline_mode = #tpu.pipeline_mode<synchronous>, transform_indices = @transform_4, window_bounds = array<i64: 1, 4>}, {pipeline_mode = #tpu.pipeline_mode<synchronous>, transform_indices = @transform_5, window_bounds = array<i64: 4, 128>}, {pipeline_mode = #tpu.pipeline_mode<synchronous>, transform_indices = @transform_6, window_bounds = array<i64: 128, 32>}, {transform_indices = @transform_7, window_bounds = array<i64: 8, 32>}]} {
    %c0 = arith.constant 0 : index
    %c0_0 = arith.constant 0 : index
    %0 = vector.load %arg1[%c0, %c0_0] : memref<8x32xf32, #tpu.memory_space<vmem>>, vector<8x32xf32>
    %1 = arith.mulf %0, %0 : vector<8x32xf32>
    %2 = tpu.concatenate %0, %1 in 1 : vector<8x32xf32>, vector<8x32xf32> -> vector<8x64xf32>
    %c0_1 = arith.constant 0 : index
    %c0_2 = arith.constant 0 : index
    %3 = vector.load %arg4[%c0_1, %c0_2] : memref<64x4xf32, #tpu.memory_space<vmem>>, vector<64x4xf32>
    %cst = arith.constant dense<0.000000e+00> : vector<8x4xf32>
    %4 = tpu.matmul %2, %3, %cst {dimension_numbers = #tpu.dot_dimension_numbers<[1], [0], [0], [1], [0, 0, 1, 1], [], []>} : vector<8x64xf32>, vector<64x4xf32>, vector<8x4xf32> -> vector<8x4xf32>
    %c0_3 = arith.constant 0 : index
    %c0_4 = arith.constant 0 : index
    %5 = vector.load %arg5[%c0_3, %c0_4] : memref<1x4xf32, #tpu.memory_space<vmem>>, vector<1x4xf32>
    %6 = vector.broadcast %5 : vector<1x4xf32> to vector<8x4xf32>
    %7 = arith.addf %4, %6 : vector<8x4xf32>
    %cst_5 = arith.constant dense<0xFF800000> : vector<8xf32>
    %8 = vector.multi_reduction <maximumf>, %7, %cst_5 [1] : vector<8x4xf32> to vector<8xf32>
    %9 = vector.shape_cast %8 : vector<8xf32> to vector<8x1xf32>
    %10 = vector.broadcast %9 : vector<8x1xf32> to vector<8x4xf32>
    %11 = arith.subf %7, %10 : vector<8x4xf32>
    %12 = math.exp %11 : vector<8x4xf32>
    %cst_6 = arith.constant dense<0.000000e+00> : vector<8xf32>
    %13 = vector.multi_reduction <add>, %12, %cst_6 [1] : vector<8x4xf32> to vector<8xf32>
    %14 = vector.shape_cast %13 : vector<8xf32> to vector<8x1xf32>
    %15 = tpu.reciprocal %14 {approx = true} : vector<8x1xf32> -> vector<8x1xf32>
    %16 = vector.broadcast %15 : vector<8x1xf32> to vector<8x4xf32>
    %17 = arith.mulf %12, %16 : vector<8x4xf32>
    %c0_7 = arith.constant 0 : index
    %c0_8 = arith.constant 0 : index
    %18 = vector.load %arg2[%c0_7, %c0_8] : memref<32x128xf32, #tpu.memory_space<vmem>>, vector<32x128xf32>
    %cst_9 = arith.constant dense<0.000000e+00> : vector<8x128xf32>
    %19 = tpu.matmul %0, %18, %cst_9 {dimension_numbers = #tpu.dot_dimension_numbers<[1], [0], [0], [1], [0, 0, 1, 1], [], []>} : vector<8x32xf32>, vector<32x128xf32>, vector<8x128xf32> -> vector<8x128xf32>
    %c0_10 = arith.constant 0 : index
    %c0_11 = arith.constant 0 : index
    %20 = vector.load %arg3[%c0_10, %c0_11] : memref<1x128xf32, #tpu.memory_space<vmem>>, vector<1x128xf32>
    %21 = vector.broadcast %20 : vector<1x128xf32> to vector<8x128xf32>
    %22 = arith.addf %19, %21 : vector<8x128xf32>
    %cst_12 = arith.constant 5.000000e-01 : f32
    %23 = vector.broadcast %cst_12 : f32 to vector<8x128xf32>
    %24 = arith.mulf %23, %22 : vector<8x128xf32>
    %25 = math.tanh %24 : vector<8x128xf32>
    %cst_13 = arith.constant 1.000000e+00 : f32
    %26 = vector.broadcast %cst_13 : f32 to vector<8x128xf32>
    %27 = arith.addf %25, %26 : vector<8x128xf32>
    %cst_14 = arith.constant 5.000000e-01 : f32
    %28 = vector.broadcast %cst_14 : f32 to vector<8x128xf32>
    %29 = arith.mulf %28, %27 : vector<8x128xf32>
    %c0_15 = arith.constant 0 : index
    %c0_16 = arith.constant 0 : index
    %30 = vector.load %arg6[%c0_15, %c0_16] : memref<4x128xf32, #tpu.memory_space<vmem>>, vector<4x128xf32>
    %cst_17 = arith.constant dense<0.000000e+00> : vector<8x128xf32>
    %31 = tpu.matmul %17, %30, %cst_17 {dimension_numbers = #tpu.dot_dimension_numbers<[1], [0], [0], [1], [0, 0, 1, 1], [], []>} : vector<8x4xf32>, vector<4x128xf32>, vector<8x128xf32> -> vector<8x128xf32>
    %32 = arith.mulf %29, %31 : vector<8x128xf32>
    %c0_18 = arith.constant 0 : index
    %c0_19 = arith.constant 0 : index
    %33 = vector.load %arg7[%c0_18, %c0_19] : memref<128x32xf32, #tpu.memory_space<vmem>>, vector<128x32xf32>
    %cst_20 = arith.constant dense<0.000000e+00> : vector<8x32xf32>
    %34 = tpu.matmul %32, %33, %cst_20 {dimension_numbers = #tpu.dot_dimension_numbers<[1], [0], [0], [1], [0, 0, 1, 1], [], []>} : vector<8x128xf32>, vector<128x32xf32>, vector<8x32xf32> -> vector<8x32xf32>
    %c0_21 = arith.constant 0 : index
    %c0_22 = arith.constant 0 : index
    %35 = vector.load %arg8[%c0_21, %c0_22] : memref<8x32xf32, #tpu.memory_space<vmem>>, vector<8x32xf32>
    tpu.vector_store %arg8[%c0_21, %c0_22], %34 {strides = array<i32>} : memref<8x32xf32, #tpu.memory_space<vmem>>, vector<8x32xf32>,
    return
  }
  func.func @transform_0(%arg0: i32) -> (i32, i32) {
    %c0_i32 = arith.constant 0 : i32
    %c0_i32_0 = arith.constant 0 : i32
    return %arg0, %c0_i32 : i32, i32
  }
  func.func @transform_1(%arg0: i32) -> (i32, i32) {
    %c0_i32 = arith.constant 0 : i32
    %c0_i32_0 = arith.constant 0 : i32
    %c0_i32_1 = arith.constant 0 : i32
    return %c0_i32, %c0_i32_0 : i32, i32
  }
  func.func @transform_2(%arg0: i32) -> (i32, i32) {
    %c0_i32 = arith.constant 0 : i32
    %c0_i32_0 = arith.constant 0 : i32
    %c0_i32_1 = arith.constant 0 : i32
    return %c0_i32, %c0_i32_0 : i32, i32
  }
  func.func @transform_3(%arg0: i32) -> (i32, i32) {
    %c0_i32 = arith.constant 0 : i32
    %c0_i32_0 = arith.constant 0 : i32
    %c0_i32_1 = arith.constant 0 : i32
    return %c0_i32, %c0_i32_0 : i32, i32
  }
  func.func @transform_4(%arg0: i32) -> (i32, i32) {
    %c0_i32 = arith.constant 0 : i32
    %c0_i32_0 = arith.constant 0 : i32
    %c0_i32_1 = arith.constant 0 : i32
    return %c0_i32, %c0_i32_0 : i32, i32
  }
  func.func @transform_5(%arg0: i32) -> (i32, i32) {
    %c0_i32 = arith.constant 0 : i32
    %c0_i32_0 = arith.constant 0 : i32
    %c0_i32_1 = arith.constant 0 : i32
    return %c0_i32, %c0_i32_0 : i32, i32
  }
  func.func @transform_6(%arg0: i32) -> (i32, i32) {
    %c0_i32 = arith.constant 0 : i32
    %c0_i32_0 = arith.constant 0 : i32
    %c0_i32_1 = arith.constant 0 : i32
    return %c0_i32, %c0_i32_0 : i32, i32
  }
  func.func @transform_7(%arg0: i32) -> (i32, i32) {
    %c0_i32 = arith.constant 0 : i32
    %c0_i32_0 = arith.constant 0 : i32
    return %arg0, %c0_i32 : i32, i32
  }
}

</mosaic_0001>

<llo_original>
// kernel: tpu_custom_call.1
$region0: #{tpu_custom_call.1}
  #allocation0 [shape = 'u32[]', space=smem, size = 0x4, offset = 0x4, fixed_abs, tag = 'smem constant byte address 0x4 - core index']
  #allocation1 [shape = 'u32[72,128]{1,0:T(1,128)}', space=vmem, size = 0x9000, scoped, tag = 'internal scratch']
  %s0 = inlined_call_operand.vmem [shape: f32[8,32], index: 0, kind: input, shape index: {}]
  %s1 = inlined_call_operand.vmem [shape: f32[32,128], index: 1, kind: input, shape index: {}]
  %s2 = inlined_call_operand.vmem [shape: f32[1,128], index: 2, kind: input, shape index: {}]
  %s3 = inlined_call_operand.vmem [shape: f32[64,4], index: 3, kind: input, shape index: {}]
  %s4 = inlined_call_operand.vmem [shape: f32[1,4], index: 4, kind: input, shape index: {}]
  %s5 = inlined_call_operand.vmem [shape: f32[4,128], index: 5, kind: input, shape index: {}]
  %s6 = inlined_call_operand.vmem [shape: f32[128,32], index: 6, kind: input, shape index: {}]
  %s7 = inlined_call_operand.hbm [shape: f32[8,32], index: 7, kind: output, shape index: {}]
  %s8 = sld [smem:[#allocation0]]
  $region38: #{tpu_custom_call.1} parent=0
    _
  %s10 = ssub.s32 1, %s8
  %s11 = scalar_select 0, %s10, %s8
  $region1: #{tpu_custom_call.1} parent=0
    #allocation2 [shape = 'u8[4096]{0}', space=vmem, size = 0x1000, scoped, tag = 'output window, operand 0, single buffered']
    #allocation3 [shape = 's32[1]{0}', space=sflag, size = 0x4, scoped, tag = 'scoped memory for tpu_custom_call.1']
    %12 = vsyncpa [#allocation3], 0
    // Predicated region
    $region2: #{tpu_custom_call.1} parent=1 // pred_check
      _
    $region3: #{tpu_custom_call.1} parent=1 // pred_check_branch
      %14 = sbr.rel (0) target = $region5
    $region4: #{tpu_custom_call.1} parent=1 // pred_region
      _
    $region5: #{tpu_custom_call.1} parent=1 // pred_fallthru
      _
    // Predicated region
    $region6: #{tpu_custom_call.1} parent=1 // pred_check
      _
    $region7: #{tpu_custom_call.1} parent=1 // pred_check_branch
      %16 = sbr.rel (0) target = $region9
    $region8: #{tpu_custom_call.1} parent=1 // pred_region
      _
    $region9: #{tpu_custom_call.1} parent=1 // pred_fallthru
      _
    // Predicated region
    $region10: #{tpu_custom_call.1} parent=1 // pred_check
      _
    $region11: #{tpu_custom_call.1} parent=1 // pred_check_branch
      %18 = sbr.rel (0) target = $region13
    $region12: #{tpu_custom_call.1} parent=1 // pred_region
      _
    $region13: #{tpu_custom_call.1} parent=1 // pred_fallthru
      _
    // Predicated region
    $region14: #{tpu_custom_call.1} parent=1 // pred_check
      _
    $region15: #{tpu_custom_call.1} parent=1 // pred_check_branch
      %20 = sbr.rel (0) target = $region17
    $region16: #{tpu_custom_call.1} parent=1 // pred_region
      _
    $region17: #{tpu_custom_call.1} parent=1 // pred_fallthru
      _
    // Predicated region
    $region18: #{tpu_custom_call.1} parent=1 // pred_check
      _
    $region19: #{tpu_custom_call.1} parent=1 // pred_check_branch
      %22 = sbr.rel (0) target = $region21
    $region20: #{tpu_custom_call.1} parent=1 // pred_region
      _
    $region21: #{tpu_custom_call.1} parent=1 // pred_fallthru
      _
    // Predicated region
    $region22: #{tpu_custom_call.1} parent=1 // pred_check
      _
    $region23: #{tpu_custom_call.1} parent=1 // pred_check_branch
      %24 = sbr.rel (0) target = $region25
    $region24: #{tpu_custom_call.1} parent=1 // pred_region
      _
    $region25: #{tpu_custom_call.1} parent=1 // pred_fallthru
      _
    // Predicated region
    $region26: #{tpu_custom_call.1} parent=1 // pred_check
      _
    $region27: #{tpu_custom_call.1} parent=1 // pred_check_branch
      %26 = sbr.rel (0) target = $region29
    $region28: #{tpu_custom_call.1} parent=1 // pred_region
      _
    $region29: #{tpu_custom_call.1} parent=1 // pred_fallthru
      _
    %v27 = vld [vmem:[%s0] sm:$0xff]
    %v28 = vmul.f32 %v27, %v27
    %30 = vrot.lane.b32.xlu0 %v28, 32
    %v31 = vpop.permute.xlu0 %30
    %vm33 = vcmask 261120
    %v34 = vsel %vm33, %v27, %v31
    %v35 = vld [vmem:[%s3] sm:$0xff]
    %v36 = vld [vmem:[%s3 + $0x8] sm:$0xff]
    %v37 = vld [vmem:[%s3 + $0x10] sm:$0xff]
    %v38 = vld [vmem:[%s3 + $0x18] sm:$0xff]
    %v39 = vld [vmem:[%s3 + $0x20] sm:$0xff]
    %v40 = vld [vmem:[%s3 + $0x28] sm:$0xff]
    %v41 = vld [vmem:[%s3 + $0x30] sm:$0xff]
    %v42 = vld [vmem:[%s3 + $0x38] sm:$0xff]
    %v43 = vld [vmem:[%s4] sm:$0x1]
    %v45 = vperm.slane %v43, 0
    %vm47 = vcmask 523264
    %v49 = vsel %vm47, %v34, 0
    %51 = vmatpush.msra.mxu0 0.0
    %52 = vmatpush.msra.mxu0 0.0
    %53 = vmatpush.msra.mxu0 0.0
    %54 = vmatpush.msra.mxu0 0.0
    %55 = vmatpush.msra.mxu0 0.0
    %56 = vmatpush.msra.mxu0 0.0
    %57 = vmatpush.msra.mxu0 0.0
    %58 = vmatpush.msra.mxu0 0.0
    %59 = vmatpush.msra.mxu0 %v42
    %60 = vmatpush.msra.mxu0 %v41
    %61 = vmatpush.msra.mxu0 %v40
    %62 = vmatpush.msra.mxu0 %v39
    %63 = vmatpush.msra.mxu0 %v38
    %64 = vmatpush.msra.mxu0 %v37
    %65 = vmatpush.msra.mxu0 %v36
    %66 = vmatpush.msra.mxu0 %v35
    %67 = vmatmul.f32.gmra.mxu0 %v49
    %v68 = vpop.f32.mrf.mxu0
    %v69 = vadd.f32 %v45, %v68
    %70 = vdwg.mxu0
    %vm71 = vcmask 31744
    %v72 = vsel %vm71, %v69, -inf
    %73 = vmax.xlane.f32.xlu0 %v72
    %v74 = vpop.xlane.xlu0 %73
    %v75 = vsub.f32 %v69, %v74
    %v76 = vmul.f32 %v75, 1.442695
    %v77 = vpow.pop %v76
    %v78 = vsel %vm71, %v77, 0.0
    %79 = vadd.xlane.f32.xlu0 %v78
    %v80 = vpop.xlane.xlu0 %79
    %v81 = vrcp.pop %v80
    %v82 = vmul.f32 %v77, %v81
    %v83 = vld [vmem:[%s1] sm:$0xff]
    %v84 = vld [vmem:[%s1 + $0x8] sm:$0xff]
    %v85 = vld [vmem:[%s1 + $0x10] sm:$0xff]
    %v86 = vld [vmem:[%s1 + $0x18] sm:$0xff]
    %v87 = vld [vmem:[%s2] sm:$0x1]
    %v89 = vperm.slane %v87, 0
    %v92 = vsel %vm33, %v27, 0
    %94 = vmatpush.msra.mxu0 0.0
    %95 = vmatpush.msra.mxu0 0.0
    %96 = vmatpush.msra.mxu0 0.0
    %97 = vmatpush.msra.mxu0 0.0
    %98 = vmatpush.msra.mxu0 0.0
    %99 = vmatpush.msra.mxu0 0.0
    %100 = vmatpush.msra.mxu0 0.0
    %101 = vmatpush.msra.mxu0 0.0
    %102 = vmatpush.msra.mxu0 0.0
    %103 = vmatpush.msra.mxu0 0.0
    %104 = vmatpush.msra.mxu0 0.0
    %105 = vmatpush.msra.mxu0 0.0
    %106 = vmatpush.msra.mxu0 %v86
    %107 = vmatpush.msra.mxu0 %v85
    %108 = vmatpush.msra.mxu0 %v84
    %109 = vmatpush.msra.mxu0 %v83
    %110 = vmatmul.f32.gmra.mxu0 %v92
    %v111 = vpop.f32.mrf.mxu0
    %v112 = vadd.f32 %v89, %v111
    %113 = vdwg.mxu0
    %v114 = vmul.f32 %v112, 0.5
    %v115 = vtanh.pop %v114
    %v116 = vadd.f32 %v115, 1.0
    %v117 = vmul.f32 %v116, 0.5
    %v118 = vld [vmem:[%s5] sm:$0xf]
    %v120 = vsel %vm71, %v82, 0
    %vm122 = vcmask 1043456
    %v124 = vsel %vm122, %v118, 0
    %126 = vmatpush.msra.mxu0 0.0
    %127 = vmatpush.msra.mxu0 0.0
    %128 = vmatpush.msra.mxu0 0.0
    %129 = vmatpush.msra.mxu0 0.0
    %130 = vmatpush.msra.mxu0 0.0
    %131 = vmatpush.msra.mxu0 0.0
    %132 = vmatpush.msra.mxu0 0.0
    %133 = vmatpush.msra.mxu0 0.0
    %134 = vmatpush.msra.mxu0 0.0
    %135 = vmatpush.msra.mxu0 0.0
    %136 = vmatpush.msra.mxu0 0.0
    %137 = vmatpush.msra.mxu0 0.0
    %138 = vmatpush.msra.mxu0 0.0
    %139 = vmatpush.msra.mxu0 0.0
    %140 = vmatpush.msra.mxu0 0.0
    %141 = vmatpush.msra.mxu0 %v124
    %142 = vmatmul.f32.gmra.mxu0 %v120
    %v143 = vpop.f32.mrf.mxu0
    %v144 = vadd.f32 0.0, %v143
    %145 = vdwg.mxu0
    %v146 = vmul.f32 %v117, %v144
    %v147 = vld [vmem:[%s6] sm:$0xff]
    %v148 = vld [vmem:[%s6 + $0x8] sm:$0xff]
    %v149 = vld [vmem:[%s6 + $0x10] sm:$0xff]
    %v150 = vld [vmem:[%s6 + $0x18] sm:$0xff]
    %v151 = vld [vmem:[%s6 + $0x20] sm:$0xff]
    %v152 = vld [vmem:[%s6 + $0x28] sm:$0xff]
    %v153 = vld [vmem:[%s6 + $0x30] sm:$0xff]
    %v154 = vld [vmem:[%s6 + $0x38] sm:$0xff]
    %v155 = vld [vmem:[%s6 + $0x40] sm:$0xff]
    %v156 = vld [vmem:[%s6 + $0x48] sm:$0xff]
    %v157 = vld [vmem:[%s6 + $0x50] sm:$0xff]
    %v158 = vld [vmem:[%s6 + $0x58] sm:$0xff]
    %v159 = vld [vmem:[%s6 + $0x60] sm:$0xff]
    %v160 = vld [vmem:[%s6 + $0x68] sm:$0xff]
    %v161 = vld [vmem:[%s6 + $0x70] sm:$0xff]
    %v162 = vld [vmem:[%s6 + $0x78] sm:$0xff]
    %163 = vmatpush.msra.mxu0 %v162
    %164 = vmatpush.msra.mxu0 %v161
    %165 = vmatpush.msra.mxu0 %v160
    %166 = vmatpush.msra.mxu0 %v159
    %167 = vmatpush.msra.mxu0 %v158
    %168 = vmatpush.msra.mxu0 %v157
    %169 = vmatpush.msra.mxu0 %v156
    %170 = vmatpush.msra.mxu0 %v155
    %171 = vmatpush.msra.mxu0 %v154
    %172 = vmatpush.msra.mxu0 %v153
    %173 = vmatpush.msra.mxu0 %v152
    %174 = vmatpush.msra.mxu0 %v151
    %175 = vmatpush.msra.mxu0 %v150
    %176 = vmatpush.msra.mxu0 %v149
    %177 = vmatpush.msra.mxu0 %v148
    %178 = vmatpush.msra.mxu0 %v147
    %179 = vmatmul.f32.gmra.mxu0 %v146
    %v180 = vpop.f32.mrf.mxu0
    %v181 = vadd.f32 0.0, %v180
    %182 = vdwg.mxu0
    %183 = vst.msk [vmem:[#allocation2] sm:$0xff] %vm33, %v181
    // Predicated region
    $region30: #{tpu_custom_call.1} parent=1 // pred_check
      _
    $region31: #{tpu_custom_call.1} parent=1 // pred_check_branch
      %185 = sbr.rel (0) target = $region33
    $region32: #{tpu_custom_call.1} parent=1 // pred_region
      %187 = vsyncadd [#allocation3], 0
      %s189 = sshll.u32 [#allocation2], 4
      %s190 = int_to_ptr.vmem [resolvable:$true] %s189
      %s191 = sshll.u32 %s7, 4
      %s192 = int_to_ptr.hbm [resolvable:$true] %s191
      %194 = dma.vmem_to_hbm [thread:$0]  %s190, 128, %s192, [#allocation3]
    $region33: #{tpu_custom_call.1} parent=1 // pred_fallthru
      _
    // Predicated region
    $region34: #{tpu_custom_call.1} parent=1 // pred_check
      _
    $region35: #{tpu_custom_call.1} parent=1 // pred_check_branch
      %196 = sbr.rel (0) target = $region37
    $region36: #{tpu_custom_call.1} parent=1 // pred_region
      %198 = dma.done [#allocation3], 128
    $region37: #{tpu_custom_call.1} parent=1 // pred_fallthru
      _
    %199 = vsyncpa [#allocation3], 1

</llo_original>
